<compile_context>
chip_gen: v7x
topology: tpu7x:2x2x1
jax: 0.10.0
libtpu: 0.0.40
codegen_flags: <defaults>
</compile_context>

<pallas_src>
import jax
import jax.numpy as jnp
from jax.experimental import pallas as pl
from jax.experimental.pallas import tpu as pltpu

K_CONST = 1.4142
N_EXP = 6
COEFF0 = -0.2888
COEFF1 = -1.769
COEFF2 = 1.0 / COEFF0            # python-double, cast to f32 at use (like torch)

LANES = 512                      # lane-dense layout: multiple of 128
DEFAULT_TILE_ROWS = 4096         # 4096 * 512 * 4 B = 8 MiB per block
_INV_POW2N = 1.0 / 2 ** N_EXP    # exact power-of-two reciprocal


def _erf_constants(sf):
    """Scalar constants of IntGELU_IBERT.int_erf / forward (float32)."""
    sf_erf = sf / jnp.float32(K_CONST)
    b_int = jnp.floor(jnp.float32(COEFF1) / sf_erf)
    c_int = jnp.floor(jnp.float32(COEFF2) / (sf_erf * sf_erf))
    sigmoid_sf = (sf_erf * sf_erf) * jnp.float32(COEFF0) * jnp.float32(2 ** N_EXP)
    shift_int = jnp.floor(jnp.float32(1.0) / sigmoid_sf)
    out_sf = sf * sigmoid_sf / jnp.float32(2.0)
    return b_int, c_int, shift_int, out_sf


def _int_gelu_elementwise(x, first, neg_b, c_int, shift_int, out_sf, exact_divide):
    """Shared elementwise body (used by the kernel and the ragged-tail path)."""
    x_int = x / first if exact_divide else x * first
    t = jnp.minimum(jnp.abs(x_int), neg_b) - neg_b        # == min(|x|, -b) + b
    mag = t * t + c_int
    # sign(x)==0 case is irrelevant: the result is multiplied by x_int anyway.
    y_int = jnp.where(x_int < 0, -mag, mag)
    sigmoid_int = jnp.floor(y_int * jnp.float32(_INV_POW2N))   # floor(y / 2**n)
    return x_int * (sigmoid_int + shift_int) * out_sf


def _make_kernel(exact_divide):
    def kernel(scal_ref, x_ref, out_ref):
        first = scal_ref[0]          # sf (exact divide) or 1/sf (fast path)
        neg_b = scal_ref[1]          # -b_int, precomputed on scalar path
        c_int = scal_ref[2]
        shift_int = scal_ref[3]
        out_sf = scal_ref[4]
        out_ref[...] = _int_gelu_elementwise(
            x_ref[...], first, neg_b, c_int, shift_int, out_sf, exact_divide)
    return kernel


def _choose_tile_rows(n_rows, tile_rows):
    tile_rows = max(8, (int(tile_rows) // 8) * 8)
    # Clamp so the grid has >= 2 steps whenever possible (v7x has 2 TCs).
    half = 8 * pl.cdiv(pl.cdiv(n_rows, 2), 8)
    tile_rows = min(tile_rows, max(8, half))
    if tile_rows >= n_rows:
        tile_rows = n_rows          # single full-extent block (always legal)
    return tile_rows


def int_gelu_ibert(x, scaling_factor, *, tile_rows=None, exact_divide=True):
    """Pallas TPU IntGELU_IBERT.forward. Returns (out, out_scaling_factor)."""
    orig_shape = x.shape
    x_flat = jnp.ravel(x).astype(jnp.float32)
    total = int(x_flat.shape[0])

    sf = jnp.asarray(scaling_factor, jnp.float32).reshape(())
    b_int, c_int, shift_int, out_sf = _erf_constants(sf)
    neg_b = -b_int
    first = sf if exact_divide else jnp.float32(1.0) / sf
    scalars = jnp.stack([first, neg_b, c_int, shift_int, out_sf])

    n_rows = total // LANES
    tail = total - n_rows * LANES

    if n_rows == 0:
        # Input smaller than one lane-row: pure jnp (no kernel launch needed).
        out_flat = _int_gelu_elementwise(
            x_flat, first, neg_b, c_int, shift_int, out_sf, exact_divide)
        return out_flat.reshape(orig_shape), out_sf.reshape(1)

    main_len = n_rows * LANES
    x_main = (x_flat[:main_len] if tail else x_flat).reshape(n_rows, LANES)

    if tile_rows is None:
        tile_rows = DEFAULT_TILE_ROWS
    tile_rows = _choose_tile_rows(n_rows, tile_rows)
    grid_rows = pl.cdiv(n_rows, tile_rows)

    block_bytes = tile_rows * LANES * 4
    # in + out, double-buffered, plus headroom; safe on v5e/v6e/v7x.
    vmem_limit = int(max(32 * 1024 * 1024, 4 * block_bytes + (4 << 20)))

    out_main = pl.pallas_call(
        _make_kernel(exact_divide),
        out_shape=jax.ShapeDtypeStruct((n_rows, LANES), jnp.float32),
        grid=(grid_rows,),
        in_specs=[
            pl.BlockSpec(memory_space=pltpu.MemorySpace.SMEM),      # scalars
            pl.BlockSpec((tile_rows, LANES), lambda i: (i, 0)),     # x tile
        ],
        out_specs=pl.BlockSpec((tile_rows, LANES), lambda i: (i, 0)),
        compiler_params=pltpu.CompilerParams(
            dimension_semantics=("parallel",),
            vmem_limit_bytes=vmem_limit,
        ),
    )(scalars, x_main)

    out_flat = out_main.reshape(main_len)
    if tail:
        tail_out = _int_gelu_elementwise(
            x_flat[main_len:], first, neg_b, c_int, shift_int, out_sf, exact_divide)
        out_flat = jnp.concatenate([out_flat, tail_out])

    return out_flat.reshape(orig_shape), out_sf.reshape(1)


def _reference(x, scaling_factor):
    """Pure-JAX replica of the PyTorch IntGELU_IBERT.forward (for checking)."""
    sf = jnp.asarray(scaling_factor, jnp.float32).reshape(())
    x = x.astype(jnp.float32)
    x_int = x / sf
    b_int, c_int, shift_int, out_sf = _erf_constants(sf)
    sign = jnp.sign(x_int)
    abs_int = jnp.minimum(jnp.abs(x_int), -b_int)
    y_int = sign * ((abs_int + b_int) ** 2 + c_int)
    sigmoid_int = jnp.floor(y_int / jnp.float32(2 ** N_EXP))
    out = x_int * (sigmoid_int + shift_int) * out_sf
    return out, out_sf.reshape(1)


if __name__ == "__main__":
    key = jax.random.PRNGKey(0)
    batch, seq, hidden = 2, 8, 32
    x = jax.random.normal(key, (batch, seq, hidden), dtype=jnp.float32)
    scaling_factor = jnp.array([0.05], dtype=jnp.float32)

    out, out_scale = int_gelu_ibert(x, scaling_factor)
    out = jax.block_until_ready(out)
    out_scale = jax.block_until_ready(out_scale)

    ref_out, ref_scale = _reference(x, scaling_factor)
    assert out.shape == x.shape and out.dtype == jnp.float32
    assert jnp.allclose(out, ref_out, rtol=1e-5, atol=1e-5), "output mismatch"
    assert jnp.allclose(out_scale, ref_scale, rtol=1e-6, atol=0.0), "scale mismatch"

    # Ragged-shape check: exercises the aligned-prefix kernel + jnp tail path.
    x2 = jax.random.normal(jax.random.PRNGKey(1), (3, 7, 33), dtype=jnp.float32)
    out2, _ = int_gelu_ibert(x2, scaling_factor)
    out2 = jax.block_until_ready(out2)
    ref2, _ = _reference(x2, scaling_factor)
    assert jnp.allclose(out2, ref2, rtol=1e-5, atol=1e-5), "ragged output mismatch"

    print("KERNEL_OK")
</pallas_src>

<mosaic_0001>
module attributes {stable_mosaic.version = 11 : i64} {
  func.func @kernel(%arg0: i32, %arg1: memref<5xf32, #tpu.memory_space<smem>>, %arg2: memref<1x512xf32, #tpu.memory_space<vmem>>, %arg3: memref<1x512xf32, #tpu.memory_space<vmem>>) attributes {dimension_semantics = [#tpu.dimension_semantics<parallel>], iteration_bounds = array<i64: 1>, scalar_prefetch = 0 : i64, scratch_operands = 0 : i64, tpu.core_type = #tpu.core_type<tc>, window_params = [{transform_indices = @transform_0, window_bounds = array<i64: 5>}, {transform_indices = @transform_1, window_bounds = array<i64: 1, 512>}, {transform_indices = @transform_2, window_bounds = array<i64: 1, 512>}]} {
    %c0 = arith.constant 0 : index
    %0 = memref.load %arg1[%c0] : memref<5xf32, #tpu.memory_space<smem>>
    %c1 = arith.constant 1 : index
    %1 = memref.load %arg1[%c1] : memref<5xf32, #tpu.memory_space<smem>>
    %c2 = arith.constant 2 : index
    %2 = memref.load %arg1[%c2] : memref<5xf32, #tpu.memory_space<smem>>
    %c3 = arith.constant 3 : index
    %3 = memref.load %arg1[%c3] : memref<5xf32, #tpu.memory_space<smem>>
    %c4 = arith.constant 4 : index
    %4 = memref.load %arg1[%c4] : memref<5xf32, #tpu.memory_space<smem>>
    %c0_0 = arith.constant 0 : index
    %c0_1 = arith.constant 0 : index
    %5 = vector.load %arg2[%c0_0, %c0_1] : memref<1x512xf32, #tpu.memory_space<vmem>>, vector<1x512xf32>
    %6 = vector.broadcast %0 : f32 to vector<1x512xf32>
    %7 = arith.divf %5, %6 : vector<1x512xf32>
    %8 = math.absf %7 : vector<1x512xf32>
    %9 = vector.broadcast %1 : f32 to vector<1x512xf32>
    %10 = arith.minimumf %8, %9 : vector<1x512xf32>
    %11 = vector.broadcast %1 : f32 to vector<1x512xf32>
    %12 = arith.subf %10, %11 : vector<1x512xf32>
    %13 = arith.mulf %12, %12 : vector<1x512xf32>
    %14 = vector.broadcast %2 : f32 to vector<1x512xf32>
    %15 = arith.addf %13, %14 : vector<1x512xf32>
    %cst = arith.constant 0.000000e+00 : f32
    %16 = vector.broadcast %cst : f32 to vector<1x512xf32>
    %17 = arith.cmpf olt, %7, %16 : vector<1x512xf32>
    %cst_2 = arith.constant 0.000000e+00 : f32
    %18 = vector.broadcast %cst_2 : f32 to vector<1x512xf32>
    %19 = arith.subf %18, %15 : vector<1x512xf32>
    %20 = arith.select %17, %19, %15 : vector<1x512xi1>, vector<1x512xf32>
    %cst_3 = arith.constant 1.562500e-02 : f32
    %21 = vector.broadcast %cst_3 : f32 to vector<1x512xf32>
    %22 = arith.mulf %20, %21 : vector<1x512xf32>
    %23 = math.floor %22 : vector<1x512xf32>
    %24 = vector.broadcast %3 : f32 to vector<1x512xf32>
    %25 = arith.addf %23, %24 : vector<1x512xf32>
    %26 = arith.mulf %7, %25 : vector<1x512xf32>
    %27 = vector.broadcast %4 : f32 to vector<1x512xf32>
    %28 = arith.mulf %26, %27 : vector<1x512xf32>
    %c0_4 = arith.constant 0 : index
    %c0_5 = arith.constant 0 : index
    %29 = vector.load %arg3[%c0_4, %c0_5] : memref<1x512xf32, #tpu.memory_space<vmem>>, vector<1x512xf32>
    tpu.vector_store %arg3[%c0_4, %c0_5], %28 {strides = array<i32>} : memref<1x512xf32, #tpu.memory_space<vmem>>, vector<1x512xf32>,
    return
  }
  func.func @transform_0(%arg0: i32) -> i32 {
    %c0_i32 = arith.constant 0 : i32
    %c0_i32_0 = arith.constant 0 : i32
    return %c0_i32 : i32
  }
  func.func @transform_1(%arg0: i32) -> (i32, i32) {
    %c0_i32 = arith.constant 0 : i32
    %c0_i32_0 = arith.constant 0 : i32
    return %arg0, %c0_i32 : i32, i32
  }
  func.func @transform_2(%arg0: i32) -> (i32, i32) {
    %c0_i32 = arith.constant 0 : i32
    %c0_i32_0 = arith.constant 0 : i32
    return %arg0, %c0_i32 : i32, i32
  }
}

</mosaic_0001>

<llo_original>
// kernel: tpu_custom_call.1
$region0: #{tpu_custom_call.1}
  #allocation0 [shape = 'u32[]', space=smem, size = 0x4, offset = 0x4, fixed_abs, tag = 'smem constant byte address 0x4 - core index']
  #allocation1 [shape = 'u32[144,128]{1,0:T(1,128)}', space=vmem, size = 0x12000, scoped, tag = 'internal scratch']
  %s0 = inlined_call_operand.hbm [shape: f32[5], index: 0, kind: input, shape index: {}]
  %s1 = inlined_call_operand.hbm [shape: f32[1,512], index: 1, kind: input, shape index: {}]
  %s2 = inlined_call_operand.hbm [shape: f32[1,512], index: 2, kind: output, shape index: {}]
  %s3 = sld [smem:[#allocation0]]
  $region26: #{tpu_custom_call.1} parent=0
    _
  %s5 = ssub.s32 1, %s3
  %s6 = scalar_select 0, %s5, %s3
  $region1: #{tpu_custom_call.1} parent=0
    #allocation2 [shape = 'u8[512]{0}', space=smem, size = 0x200, scoped, tag = 'input window, operand 0, single buffered']
    #allocation3 [shape = 's32[1]{0}', space=sflag, size = 0x4, scoped, tag = 'scoped memory for tpu_custom_call.1']
    #allocation4 [shape = 's32[1]{0}', space=sflag, size = 0x4, scoped, tag = 'scoped memory for tpu_custom_call.1']
    #allocation5 [shape = 's32[1]{0}', space=sflag, size = 0x4, scoped, tag = 'scoped memory for tpu_custom_call.1']
    #allocation6 [shape = 'u8[2048]{0}', space=vmem, size = 0x800, scoped, tag = 'input window, operand 1, single buffered']
    #allocation7 [shape = 'u8[2048]{0}', space=vmem, size = 0x800, scoped, tag = 'output window, operand 0, single buffered']
    %7 = vsyncpa [#allocation5], 0
    %8 = vsyncpa [#allocation3], 0
    %9 = vsyncpa [#allocation4], 0
    // Predicated region
    $region2: #{tpu_custom_call.1} parent=1 // pred_check
      _
    $region3: #{tpu_custom_call.1} parent=1 // pred_check_branch
      %11 = sbr.rel (0) target = $region5
    $region4: #{tpu_custom_call.1} parent=1 // pred_region
      %s13 = ssub.s32 16, 16
      %14 = vsyncadd [#allocation5], %s13
      %17 = dma.hbm_to_smem %s0, 16, [#allocation2], [#allocation5]
    $region5: #{tpu_custom_call.1} parent=1 // pred_fallthru
      _
    // Predicated region
    $region6: #{tpu_custom_call.1} parent=1 // pred_check
      _
    $region7: #{tpu_custom_call.1} parent=1 // pred_check_branch
      %19 = sbr.rel (0) target = $region9
    $region8: #{tpu_custom_call.1} parent=1 // pred_region
      %s21 = ssub.s32 64, 64
      %22 = vsyncadd [#allocation3], %s21
      %s24 = sshll.u32 [#allocation6], 4
      %s25 = int_to_ptr.vmem [resolvable:$true] %s24
      %27 = dma.hbm_to_vmem [thread:$0]  %s1, 64, %s25, [#allocation3]
    $region9: #{tpu_custom_call.1} parent=1 // pred_fallthru
      _
    // Predicated region
    $region10: #{tpu_custom_call.1} parent=1 // pred_check
      _
    $region11: #{tpu_custom_call.1} parent=1 // pred_check_branch
      %29 = sbr.rel (0) target = $region13
    $region12: #{tpu_custom_call.1} parent=1 // pred_region
      %30 = dma.done [#allocation5], 16
    $region13: #{tpu_custom_call.1} parent=1 // pred_fallthru
      _
    // Predicated region
    $region14: #{tpu_custom_call.1} parent=1 // pred_check
      _
    $region15: #{tpu_custom_call.1} parent=1 // pred_check_branch
      %32 = sbr.rel (0) target = $region17
    $region16: #{tpu_custom_call.1} parent=1 // pred_region
      %33 = dma.done [#allocation3], 64
    $region17: #{tpu_custom_call.1} parent=1 // pred_fallthru
      _
    %34 = sfence
    %s35 = sld [smem:[#allocation2]]
    %s36 = sld [smem:[#allocation2 + $0x1]]
    %s37 = sld [smem:[#allocation2 + $0x2]]
    %s38 = sld [smem:[#allocation2 + $0x3]]
    %s39 = sld [smem:[#allocation2 + $0x4]]
    %v40 = vld [vmem:[#allocation6] sm:$0xf]
    %v41 = vstv %s35
    %v42 = vrcp.pop %v41
    %v43 = vmul.f32 %v40, %v42
    %v44 = vand.u32 2147483647, %v43
    %v45 = vstv %s36
    %v46 = vmin.f32 %v44, %v45
    %v47 = vsub.f32 %v46, %v45
    %v48 = vmul.f32 %v47, %v47
    %v49 = vstv %s37
    %v50 = vadd.f32 %v48, %v49
    %vm51 = vcmp.lt.f32.partialorder %v43, 0.0
    %v52 = vsub.f32 0.0, %v50
    %v53 = vsel %vm51, %v52, %v50
    %v54 = vmul.f32 %v53, 0.015625
    %v55 = vfloor.f32 %v54
    %v56 = vstv %s38
    %v57 = vadd.f32 %v55, %v56
    %v58 = vmul.f32 %v43, %v57
    %v59 = vstv %s39
    %v60 = vmul.f32 %v58, %v59
    %v61 = vlaneseq
    %vm62 = vcmp.ge.s32.totalorder %v61, 0
    %vm63 = vcmp.lt.s32.totalorder %v61, 512
    %vm64 = vmand %vm62, %vm63
    %65 = vst.msk [vmem:[#allocation7] sm:$0xf] %vm64, %v60
    // Predicated region
    $region18: #{tpu_custom_call.1} parent=1 // pred_check
      _
    $region19: #{tpu_custom_call.1} parent=1 // pred_check_branch
      %67 = sbr.rel (0) target = $region21
    $region20: #{tpu_custom_call.1} parent=1 // pred_region
      %s69 = ssub.s32 64, 64
      %70 = vsyncadd [#allocation4], %s69
      %s72 = sshll.u32 [#allocation7], 4
      %s73 = int_to_ptr.vmem [resolvable:$true] %s72
      %75 = dma.vmem_to_hbm [thread:$0]  %s73, 64, %s2, [#allocation4]
    $region21: #{tpu_custom_call.1} parent=1 // pred_fallthru
      _
    // Predicated region
    $region22: #{tpu_custom_call.1} parent=1 // pred_check
      _
    $region23: #{tpu_custom_call.1} parent=1 // pred_check_branch
      %77 = sbr.rel (0) target = $region25
    $region24: #{tpu_custom_call.1} parent=1 // pred_region
      %78 = dma.done [#allocation4], 64
    $region25: #{tpu_custom_call.1} parent=1 // pred_fallthru
      _
    %79 = vsyncpa [#allocation3], 1
    %80 = vsyncpa [#allocation4], 1
    %81 = vsyncpa [#allocation5], 1

</llo_original>
